<compile_context>
chip_gen: v7x
topology: tpu7x:2x2x1
jax: 0.10.0
libtpu: 0.0.40
codegen_flags: <defaults>
</compile_context>

<pallas_src>
import jax
import jax.numpy as jnp
from jax.experimental import pallas as pl
from jax.experimental.pallas import tpu as pltpu

SIGMA_DATA = 0.5  # matches EDMPrecond default sigma_data


def _pick_tile(S, C, *, vmem_budget_bytes=8 << 20, max_lanes=16384):
    """Largest lane-dense tile (multiple of 128) dividing S under a VMEM budget.

    Per grid step VMEM ~ 2 operands (in+out) x 2 buffers x C x TS x 4 bytes.
    Full-extent S is always legal (satisfies the (8,128) rule), so small /
    non-aligned S just uses one block along S.
    """
    budget_ts = max(128, vmem_budget_bytes // (16 * max(C, 1)))
    max_ts = min(max_lanes, budget_ts)
    if S <= max_ts:
        return S                     # single full-extent block along S
    ts = (max_ts // 128) * 128
    while ts >= 128:
        if S % ts == 0:
            return ts
        ts -= 128
    return S                         # no lane-aligned divisor; fall back to full S


def _edm_kernel(scal_ref, x_ref, w_ref, b_ref, t_ref, out_ref):
    """One grid step = one (batch, S-tile) block.

    scal_ref : SMEM (4, B)   rows = [c_skip, c_out*c_in, c_out, c_noise]
    x_ref    : VMEM (1, C, TS)  noised images, S-tile
    w_ref    : VMEM (C, C)      synthetic model channel-mix weight (resident)
    b_ref    : VMEM (C, 1)      synthetic model bias (resident)
    t_ref    : VMEM (C, 1)      synthetic model noise-embedding scale (resident)
    out_ref  : VMEM (1, C, TS)  preconditioned output tile (lane-dense store)
    """
    b = pl.program_id(0)
    c_skip = scal_ref[0, b]
    c_oc = scal_ref[1, b]        # c_out * c_in, folded: no c_in * x pre-scale pass
    c_out = scal_ref[2, b]
    c_noise = scal_ref[3, b]

    x = x_ref[0]                 # (C, TS)
    w = w_ref[...]               # (C, C)
    C = x.shape[0]

    # Channel mix on the VPU via broadcast FMAs (C is tiny; a CxC matmul would
    # use <1% of the MXU and pay result-FIFO shuffles).  Statically unrolled.
    net = w[:, 0:1] * x[0:1, :]
    for c in range(1, C):
        net = net + w[:, c:c + 1] * x[c:c + 1, :]

    # Per-channel additive term folded with c_out (tiny (C,1) compute).
    add = c_out * (b_ref[...] + c_noise * t_ref[...])   # (C, 1)

    # EDM skip combination; single unmasked lane-dense store of the whole tile.
    out_ref[0] = c_skip * x + c_oc * net + add


def edm_precond_forward(noised_images, sigma, weight, bias, t_scale, *, clamp=False):
    """noised_images: [B, C, T, H, W] f32; sigma: [B] f32.

    Returns (out, states) with states=None, matching EDMPrecond.forward."""
    if clamp:
        # TODO(synk): clamp=True uses torch.quantile-based dynamic thresholding
        # (per-batch sort/percentile); no clean Pallas TPU equivalent implemented.
        raise NotImplementedError("clamp=True (dynamic thresholding) not implemented")

    B, C, T, H, W = noised_images.shape
    S = T * H * W
    x2d = noised_images.reshape(B, C, S).astype(jnp.float32)

    # Per-batch EDM scalars precomputed outside the kernel (cheap; keeps
    # rsqrt/log off the per-grid-step path) and packed into one SMEM operand.
    sigma = sigma.astype(jnp.float32)
    sd2 = jnp.float32(SIGMA_DATA * SIGMA_DATA)
    denom = sigma * sigma + sd2
    inv_sqrt = jax.lax.rsqrt(denom)
    c_in = inv_sqrt
    c_skip = sd2 / denom
    c_out = sigma * jnp.float32(SIGMA_DATA) * inv_sqrt
    c_out_c_in = c_out * c_in
    c_noise = jnp.log(jnp.maximum(sigma, jnp.float32(1e-20))) * jnp.float32(0.25)
    scal = jnp.stack([c_skip, c_out_c_in, c_out, c_noise], axis=0)  # (4, B)

    TS = _pick_tile(S, C)
    grid = (B, pl.cdiv(S, TS))

    cost = pl.CostEstimate(
        flops=2 * B * C * C * S + 5 * B * C * S,
        transcendentals=0,
        bytes_accessed=2 * B * C * S * 4 + C * C * 4 + 2 * C * 4 + 4 * B * 4,
    )

    out = pl.pallas_call(
        _edm_kernel,
        out_shape=jax.ShapeDtypeStruct((B, C, S), jnp.float32),
        grid=grid,
        in_specs=[
            pl.BlockSpec(memory_space=pltpu.SMEM),                 # packed scalars
            pl.BlockSpec((1, C, TS), lambda b, s: (b, 0, s)),      # x tile
            pl.BlockSpec((C, C), lambda b, s: (0, 0)),             # weight (resident)
            pl.BlockSpec((C, 1), lambda b, s: (0, 0)),             # bias (resident)
            pl.BlockSpec((C, 1), lambda b, s: (0, 0)),             # t_scale (resident)
        ],
        out_specs=pl.BlockSpec((1, C, TS), lambda b, s: (b, 0, s)),
        compiler_params=pltpu.CompilerParams(
            dimension_semantics=("parallel", "parallel"),
            vmem_limit_bytes=32 * 1024 * 1024,
        ),
        cost_estimate=cost,
    )(scal, x2d, weight, bias, t_scale)

    return out.reshape(B, C, T, H, W), None


def _reference(noised_images, sigma, weight, bias, t_scale):
    """Plain-JAX reference mirroring PyTorch EDMPrecond.forward (clamp=False)."""
    sd2 = SIGMA_DATA ** 2
    padded = sigma[:, None, None, None, None]
    c_in = (padded ** 2 + sd2) ** -0.5
    c_skip = sd2 / (padded ** 2 + sd2)
    c_out = padded * SIGMA_DATA * (sd2 + padded ** 2) ** -0.5
    c_noise = jnp.log(jnp.maximum(sigma, 1e-20)) * 0.25

    B, C, T, H, W = noised_images.shape
    xin = (c_in * noised_images).reshape(B, C, -1)
    net = (jnp.einsum("oc,bcs->bos", weight, xin)
           + bias[None]
           + c_noise[:, None, None] * t_scale[None])
    net = net.reshape(B, C, T, H, W)
    return c_skip * noised_images + c_out * net


if __name__ == "__main__":
    B, C, T, H, W = 2, 4, 8, 16, 16   # S = T*H*W = 2048 -> TS = 2048, grid = (2, 1)

    key = jax.random.PRNGKey(0)
    k1, k2, k3, k4, k5 = jax.random.split(key, 5)
    noised_images = jax.random.normal(k1, (B, C, T, H, W), dtype=jnp.float32)
    sigma = jnp.exp(jax.random.normal(k2, (B,), dtype=jnp.float32))  # positive sigmas
    weight = 0.1 * jax.random.normal(k3, (C, C), dtype=jnp.float32)
    bias = 0.05 * jax.random.normal(k4, (C, 1), dtype=jnp.float32)
    t_scale = 0.05 * jax.random.normal(k5, (C, 1), dtype=jnp.float32)

    out, states = edm_precond_forward(noised_images, sigma, weight, bias, t_scale)
    out = jax.block_until_ready(out)

    ref = _reference(noised_images, sigma, weight, bias, t_scale)
    assert out.shape == (B, C, T, H, W)
    assert states is None
    assert jnp.max(jnp.abs(out - ref)) < 1e-4, "mismatch vs reference"

    print("KERNEL_OK")
</pallas_src>

<mosaic_0001>
module attributes {stable_mosaic.version = 11 : i64} {
  func.func @_edm_kernel(%arg0: i32, %arg1: i32, %arg2: memref<4x2xf32, #tpu.memory_space<smem>>, %arg3: memref<1x4x2048xf32, #tpu.memory_space<vmem>>, %arg4: memref<4x4xf32, #tpu.memory_space<vmem>>, %arg5: memref<4x1xf32, #tpu.memory_space<vmem>>, %arg6: memref<4x1xf32, #tpu.memory_space<vmem>>, %arg7: memref<1x4x2048xf32, #tpu.memory_space<vmem>>) attributes {dimension_semantics = [#tpu.dimension_semantics<parallel>, #tpu.dimension_semantics<parallel>], iteration_bounds = array<i64: 2, 1>, scalar_prefetch = 0 : i64, scratch_operands = 0 : i64, tpu.core_type = #tpu.core_type<tc>, window_params = [{transform_indices = @transform_0, window_bounds = array<i64: 4, 2>}, {transform_indices = @transform_1, window_bounds = array<i64: 1, 4, 2048>}, {pipeline_mode = #tpu.pipeline_mode<synchronous>, transform_indices = @transform_2, window_bounds = array<i64: 4, 4>}, {pipeline_mode = #tpu.pipeline_mode<synchronous>, transform_indices = @transform_3, window_bounds = array<i64: 4, 1>}, {pipeline_mode = #tpu.pipeline_mode<synchronous>, transform_indices = @transform_4, window_bounds = array<i64: 4, 1>}, {transform_indices = @transform_5, window_bounds = array<i64: 1, 4, 2048>}]} {
    %c0 = arith.constant 0 : index
    %0 = arith.index_cast %arg0 : i32 to index
    %1 = memref.load %arg2[%c0, %0] : memref<4x2xf32, #tpu.memory_space<smem>>
    %c1 = arith.constant 1 : index
    %2 = arith.index_cast %arg0 : i32 to index
    %3 = memref.load %arg2[%c1, %2] : memref<4x2xf32, #tpu.memory_space<smem>>
    %c2 = arith.constant 2 : index
    %4 = arith.index_cast %arg0 : i32 to index
    %5 = memref.load %arg2[%c2, %4] : memref<4x2xf32, #tpu.memory_space<smem>>
    %c3 = arith.constant 3 : index
    %6 = arith.index_cast %arg0 : i32 to index
    %7 = memref.load %arg2[%c3, %6] : memref<4x2xf32, #tpu.memory_space<smem>>
    %c0_0 = arith.constant 0 : index
    %c0_1 = arith.constant 0 : index
    %c0_2 = arith.constant 0 : index
    %8 = vector.load %arg3[%c0_0, %c0_1, %c0_2] : memref<1x4x2048xf32, #tpu.memory_space<vmem>>, vector<1x4x2048xf32>
    %9 = vector.shape_cast %8 : vector<1x4x2048xf32> to vector<4x2048xf32>
    %c0_3 = arith.constant 0 : index
    %c0_4 = arith.constant 0 : index
    %10 = vector.load %arg4[%c0_3, %c0_4] : memref<4x4xf32, #tpu.memory_space<vmem>>, vector<4x4xf32>
    %11 = vector.extract_strided_slice %10 {offsets = [0, 0], sizes = [4, 1], strides = [1, 1]} : vector<4x4xf32> to vector<4x1xf32>
    %12 = vector.extract_strided_slice %9 {offsets = [0, 0], sizes = [1, 2048], strides = [1, 1]} : vector<4x2048xf32> to vector<1x2048xf32>
    %13 = vector.broadcast %11 : vector<4x1xf32> to vector<4x2048xf32>
    %14 = vector.broadcast %12 : vector<1x2048xf32> to vector<4x2048xf32>
    %15 = arith.mulf %13, %14 : vector<4x2048xf32>
    %16 = vector.extract_strided_slice %10 {offsets = [0, 1], sizes = [4, 1], strides = [1, 1]} : vector<4x4xf32> to vector<4x1xf32>
    %17 = vector.extract_strided_slice %9 {offsets = [1, 0], sizes = [1, 2048], strides = [1, 1]} : vector<4x2048xf32> to vector<1x2048xf32>
    %18 = vector.broadcast %16 : vector<4x1xf32> to vector<4x2048xf32>
    %19 = vector.broadcast %17 : vector<1x2048xf32> to vector<4x2048xf32>
    %20 = arith.mulf %18, %19 : vector<4x2048xf32>
    %21 = arith.addf %15, %20 : vector<4x2048xf32>
    %22 = vector.extract_strided_slice %10 {offsets = [0, 2], sizes = [4, 1], strides = [1, 1]} : vector<4x4xf32> to vector<4x1xf32>
    %23 = vector.extract_strided_slice %9 {offsets = [2, 0], sizes = [1, 2048], strides = [1, 1]} : vector<4x2048xf32> to vector<1x2048xf32>
    %24 = vector.broadcast %22 : vector<4x1xf32> to vector<4x2048xf32>
    %25 = vector.broadcast %23 : vector<1x2048xf32> to vector<4x2048xf32>
    %26 = arith.mulf %24, %25 : vector<4x2048xf32>
    %27 = arith.addf %21, %26 : vector<4x2048xf32>
    %28 = vector.extract_strided_slice %10 {offsets = [0, 3], sizes = [4, 1], strides = [1, 1]} : vector<4x4xf32> to vector<4x1xf32>
    %29 = vector.extract_strided_slice %9 {offsets = [3, 0], sizes = [1, 2048], strides = [1, 1]} : vector<4x2048xf32> to vector<1x2048xf32>
    %30 = vector.broadcast %28 : vector<4x1xf32> to vector<4x2048xf32>
    %31 = vector.broadcast %29 : vector<1x2048xf32> to vector<4x2048xf32>
    %32 = arith.mulf %30, %31 : vector<4x2048xf32>
    %33 = arith.addf %27, %32 : vector<4x2048xf32>
    %c0_5 = arith.constant 0 : index
    %c0_6 = arith.constant 0 : index
    %34 = vector.load %arg5[%c0_5, %c0_6] : memref<4x1xf32, #tpu.memory_space<vmem>>, vector<4x1xf32>
    %c0_7 = arith.constant 0 : index
    %c0_8 = arith.constant 0 : index
    %35 = vector.load %arg6[%c0_7, %c0_8] : memref<4x1xf32, #tpu.memory_space<vmem>>, vector<4x1xf32>
    %36 = vector.broadcast %7 : f32 to vector<4x1xf32>
    %37 = arith.mulf %36, %35 : vector<4x1xf32>
    %38 = arith.addf %34, %37 : vector<4x1xf32>
    %39 = vector.broadcast %5 : f32 to vector<4x1xf32>
    %40 = arith.mulf %39, %38 : vector<4x1xf32>
    %41 = vector.broadcast %1 : f32 to vector<4x2048xf32>
    %42 = arith.mulf %41, %9 : vector<4x2048xf32>
    %43 = vector.broadcast %3 : f32 to vector<4x2048xf32>
    %44 = arith.mulf %43, %33 : vector<4x2048xf32>
    %45 = arith.addf %42, %44 : vector<4x2048xf32>
    %46 = vector.broadcast %40 : vector<4x1xf32> to vector<4x2048xf32>
    %47 = arith.addf %45, %46 : vector<4x2048xf32>
    %c0_9 = arith.constant 0 : index
    %c0_10 = arith.constant 0 : index
    %c0_11 = arith.constant 0 : index
    %48 = vector.load %arg7[%c0_9, %c0_10, %c0_11] : memref<1x4x2048xf32, #tpu.memory_space<vmem>>, vector<1x4x2048xf32>
    %49 = vector.shape_cast %48 : vector<1x4x2048xf32> to vector<4x2048xf32>
    %50 = vector.shape_cast %47 : vector<4x2048xf32> to vector<1x4x2048xf32>
    tpu.vector_store %arg7[%c0_9, %c0_10, %c0_11], %50 {strides = array<i32>} : memref<1x4x2048xf32, #tpu.memory_space<vmem>>, vector<1x4x2048xf32>,
    return
  }
  func.func @transform_0(%arg0: i32, %arg1: i32) -> (i32, i32) {
    %c0_i32 = arith.constant 0 : i32
    %c0_i32_0 = arith.constant 0 : i32
    %c0_i32_1 = arith.constant 0 : i32
    return %c0_i32, %c0_i32_0 : i32, i32
  }
  func.func @transform_1(%arg0: i32, %arg1: i32) -> (i32, i32, i32) {
    %c0_i32 = arith.constant 0 : i32
    %c0_i32_0 = arith.constant 0 : i32
    return %arg0, %c0_i32, %arg1 : i32, i32, i32
  }
  func.func @transform_2(%arg0: i32, %arg1: i32) -> (i32, i32) {
    %c0_i32 = arith.constant 0 : i32
    %c0_i32_0 = arith.constant 0 : i32
    %c0_i32_1 = arith.constant 0 : i32
    return %c0_i32, %c0_i32_0 : i32, i32
  }
  func.func @transform_3(%arg0: i32, %arg1: i32) -> (i32, i32) {
    %c0_i32 = arith.constant 0 : i32
    %c0_i32_0 = arith.constant 0 : i32
    %c0_i32_1 = arith.constant 0 : i32
    return %c0_i32, %c0_i32_0 : i32, i32
  }
  func.func @transform_4(%arg0: i32, %arg1: i32) -> (i32, i32) {
    %c0_i32 = arith.constant 0 : i32
    %c0_i32_0 = arith.constant 0 : i32
    %c0_i32_1 = arith.constant 0 : i32
    return %c0_i32, %c0_i32_0 : i32, i32
  }
  func.func @transform_5(%arg0: i32, %arg1: i32) -> (i32, i32, i32) {
    %c0_i32 = arith.constant 0 : i32
    %c0_i32_0 = arith.constant 0 : i32
    return %arg0, %c0_i32, %arg1 : i32, i32, i32
  }
}

</mosaic_0001>

<llo_original>
// kernel: tpu_custom_call.1
$region0: #{tpu_custom_call.1}
  #allocation0 [shape = 'u32[]', space=smem, size = 0x4, offset = 0x4, fixed_abs, tag = 'smem constant byte address 0x4 - core index']
  #allocation1 [shape = 'u32[144,128]{1,0:T(1,128)}', space=vmem, size = 0x12000, scoped, tag = 'internal scratch']
  %s0 = inlined_call_operand.vmem [shape: f32[4,2], index: 0, kind: input, shape index: {}]
  %s1 = inlined_call_operand.hbm [shape: f32[2,4,2048], index: 1, kind: input, shape index: {}]
  %s2 = inlined_call_operand.vmem [shape: f32[4,4], index: 2, kind: input, shape index: {}]
  %s3 = inlined_call_operand.vmem [shape: f32[4,1], index: 3, kind: input, shape index: {}]
  %s4 = inlined_call_operand.vmem [shape: f32[4,1], index: 4, kind: input, shape index: {}]
  %s5 = inlined_call_operand.hbm [shape: f32[2,4,2048], index: 5, kind: output, shape index: {}]
  %s6 = sld [smem:[#allocation0]]
  $region61: #{tpu_custom_call.1} parent=0
    _
  %s8 = ssub.s32 1, %s6
  %s9 = scalar_select 0, %s8, %s6
  $region1: #{tpu_custom_call.1} parent=0
    #allocation2 [shape = 'u8[2048]{0}', space=smem, size = 0x800, scoped, tag = 'input window, operand 0, single buffered']
    #allocation3 [shape = 's32[2]{0}', space=sflag, size = 0x8, scoped, tag = 'scoped memory for tpu_custom_call.1']
    #allocation4 [shape = 's32[2]{0}', space=sflag, size = 0x8, scoped, tag = 'scoped memory for tpu_custom_call.1']
    #allocation5 [shape = 's32[2]{0}', space=sflag, size = 0x8, scoped, tag = 'scoped memory for tpu_custom_call.1']
    #allocation6 [shape = 'u8[65536]{0}', space=vmem, size = 0x10000, scoped, tag = 'input window, operand 1']
    #allocation7 [shape = 'u8[65536]{0}', space=vmem, size = 0x10000, scoped, tag = 'output window, operand 0']
    %10 = vsyncpa [#allocation5], 0
    %11 = vsyncpa [#allocation3], 0
    %s12 = scalar_lea.sflag [#allocation3], 1
    %13 = vsyncpa %s12, 0
    %14 = vsyncpa [#allocation4], 0
    %s15 = scalar_lea.sflag [#allocation4], 1
    %16 = vsyncpa %s15, 0
    loop: start=0, step=1, limit=4
    $region2: #{tpu_custom_call.1} parent=1 // loop_pre_header
      _
    $region3: #{tpu_custom_call.1} parent=1 // loop_header
      %s18 = sphi 0, %s22
      %p19 = scmp.ge.s32.totalorder %s18, 4
      %s25 = sphi 0, %s37
      %s26 = sphi 0, %s33
      %s27 = sphi 0, %s25
      %s28 = sphi 0, %s26
      %s29 = sphi 0, %s27
      %s30 = sphi 0, %s28
      %s38 = sphi 0, %s38
      %s40 = sphi 0, %s38
      %s41 = sphi 0, %s40
      %s55 = sphi 0, %s41
      %s63 = sphi 0, %s65
      %s66 = sphi 0, %s63
      %s67 = sphi 0, %s66
      %s83 = sphi 0, %s67
      %s87 = sphi 0, %s87
      %s89 = sphi 0, %s87
      %s90 = sphi 0, %s89
      %s104 = sphi 0, %s90
      %s108 = sphi 0, %s108
      %s110 = sphi 0, %s108
      %s111 = sphi 0, %s110
      %s125 = sphi 0, %s111
      %s129 = sphi 0, %s129
      %s131 = sphi 0, %s129
      %s132 = sphi 0, %s131
      %s146 = sphi 0, %s132
      %s154 = sphi 0, %s156
      %s157 = sphi 0, %s154
      %s158 = sphi 0, %s157
      %s174 = sphi 0, %s158
    $region4: #{tpu_custom_call.1} parent=1 // loop_header_branch
      %21 = sbr.rel (%p19) target = $region8
    $region5: #{tpu_custom_call.1} parent=1 // loop_body
      %s23 = ssub.s32 %s18, 1
      %s24 = ssub.s32 %s18, 2
      %s31 = sadd.s32 1, %s26
      %p32 = scmp.ge.s32.totalorder %s31, 1
      %s33 = scalar_select %p32, 0, %s31
      %s34 = sadd.s32 1, %s25
      %s35 = scalar_select %p32, %s34, %s25
      %p36 = scmp.ge.s32.totalorder %s35, 2
      %s37 = scalar_select %p36, 0, %s35
      %s39 = sadd.s32 %s38, 1
      %p42 = scmp.eq.s32.totalorder %s18, 1
      %p43 = scmp.ne.s32.totalorder %s38, %s40
      %p44 = scmp.eq.s32.totalorder %s18, 0
      %p45 = por %p43, %p44
      %p46 = scmp.ne.s32.totalorder %s38, %s40
      %p47 = scmp.eq.s32.totalorder %s23, 1
      %p48 = por %p46, %p47
      %p49 = scmp.ne.s32.totalorder %s40, %s41
      %p50 = scmp.eq.s32.totalorder %s23, 0
      %p51 = por %p49, %p50
      %p52 = scmp.ne.s32.totalorder %s40, %s41
      %p53 = scmp.eq.s32.totalorder %s24, 1
      %p54 = por %p52, %p53
      %p56 = scmp.ne.s32.totalorder %s41, %s55
      %p57 = scmp.eq.s32.totalorder %s24, 0
      %p58 = por %p56, %p57
      %s59 = ssub.s32 %s25, %s37
      %s60 = ssub.s32 %s26, %s33
      %s61 = sor.u32 %s59, %s60
      %p62 = scmp.eq.s32.totalorder %s61, 0
      %s64 = sadd.s32 %s63, 1
      %s65 = scalar_select %p62, %s63, %s64
      %p68 = pneg %p62
      %p69 = scmp.eq.s32.totalorder %s18, 1
      %p70 = por %p68, %p69
      %p71 = scmp.ne.s32.totalorder %s63, %s66
      %p72 = scmp.eq.s32.totalorder %s18, 0
      %p73 = por %p71, %p72
      %p74 = scmp.ne.s32.totalorder %s63, %s66
      %p75 = scmp.eq.s32.totalorder %s23, 1
      %p76 = por %p74, %p75
      %p77 = scmp.ne.s32.totalorder %s66, %s67
      %p78 = scmp.eq.s32.totalorder %s23, 0
      %p79 = por %p77, %p78
      %p80 = scmp.ne.s32.totalorder %s66, %s67
      %p81 = scmp.eq.s32.totalorder %s24, 1
      %p82 = por %p80, %p81
      %p84 = scmp.ne.s32.totalorder %s67, %s83
      %p85 = scmp.eq.s32.totalorder %s24, 0
      %p86 = por %p84, %p85
      %s88 = sadd.s32 %s87, 1
      %p91 = scmp.eq.s32.totalorder %s18, 1
      %p92 = scmp.ne.s32.totalorder %s87, %s89
      %p93 = scmp.eq.s32.totalorder %s18, 0
      %p94 = por %p92, %p93
      %p95 = scmp.ne.s32.totalorder %s87, %s89
      %p96 = scmp.eq.s32.totalorder %s23, 1
      %p97 = por %p95, %p96
      %p98 = scmp.ne.s32.totalorder %s89, %s90
      %p99 = scmp.eq.s32.totalorder %s23, 0
      %p100 = por %p98, %p99
      %p101 = scmp.ne.s32.totalorder %s89, %s90
      %p102 = scmp.eq.s32.totalorder %s24, 1
      %p103 = por %p101, %p102
      %p105 = scmp.ne.s32.totalorder %s90, %s104
      %p106 = scmp.eq.s32.totalorder %s24, 0
      %p107 = por %p105, %p106
      %s109 = sadd.s32 %s108, 1
      %p112 = scmp.eq.s32.totalorder %s18, 1
      %p113 = scmp.ne.s32.totalorder %s108, %s110
      %p114 = scmp.eq.s32.totalorder %s18, 0
      %p115 = por %p113, %p114
      %p116 = scmp.ne.s32.totalorder %s108, %s110
      %p117 = scmp.eq.s32.totalorder %s23, 1
      %p118 = por %p116, %p117
      %p119 = scmp.ne.s32.totalorder %s110, %s111
      %p120 = scmp.eq.s32.totalorder %s23, 0
      %p121 = por %p119, %p120
      %p122 = scmp.ne.s32.totalorder %s110, %s111
      %p123 = scmp.eq.s32.totalorder %s24, 1
      %p124 = por %p122, %p123
      %p126 = scmp.ne.s32.totalorder %s111, %s125
      %p127 = scmp.eq.s32.totalorder %s24, 0
      %p128 = por %p126, %p127
      %s130 = sadd.s32 %s129, 1
      %p133 = scmp.eq.s32.totalorder %s18, 1
      %p134 = scmp.ne.s32.totalorder %s129, %s131
      %p135 = scmp.eq.s32.totalorder %s18, 0
      %p136 = por %p134, %p135
      %p137 = scmp.ne.s32.totalorder %s129, %s131
      %p138 = scmp.eq.s32.totalorder %s23, 1
      %p139 = por %p137, %p138
      %p140 = scmp.ne.s32.totalorder %s131, %s132
      %p141 = scmp.eq.s32.totalorder %s23, 0
      %p142 = por %p140, %p141
      %p143 = scmp.ne.s32.totalorder %s131, %s132
      %p144 = scmp.eq.s32.totalorder %s24, 1
      %p145 = por %p143, %p144
      %p147 = scmp.ne.s32.totalorder %s132, %s146
      %p148 = scmp.eq.s32.totalorder %s24, 0
      %p149 = por %p147, %p148
      %s150 = ssub.s32 %s25, %s37
      %s151 = ssub.s32 %s26, %s33
      %s152 = sor.u32 %s150, %s151
      %p153 = scmp.eq.s32.totalorder %s152, 0
      %s155 = sadd.s32 %s154, 1
      %s156 = scalar_select %p153, %s154, %s155
      %p159 = pneg %p153
      %p160 = scmp.eq.s32.totalorder %s18, 1
      %p161 = por %p159, %p160
      %p162 = scmp.ne.s32.totalorder %s154, %s157
      %p163 = scmp.eq.s32.totalorder %s18, 0
      %p164 = por %p162, %p163
      %p165 = scmp.ne.s32.totalorder %s154, %s157
      %p166 = scmp.eq.s32.totalorder %s23, 1
      %p167 = por %p165, %p166
      %p168 = scmp.ne.s32.totalorder %s157, %s158
      %p169 = scmp.eq.s32.totalorder %s23, 0
      %p170 = por %p168, %p169
      %p171 = scmp.ne.s32.totalorder %s157, %s158
      %p172 = scmp.eq.s32.totalorder %s24, 1
      %p173 = por %p171, %p172
      %p175 = scmp.ne.s32.totalorder %s158, %s174
      %p176 = scmp.eq.s32.totalorder %s24, 0
      %p177 = por %p175, %p176
      %p178 = scmp.le.s32.totalorder 1, %s18
      %p179 = scmp.lt.s32.totalorder %s18, 3
      %p180 = pnand %p178, %p179
      %p181 = pneg %p180
      // Predicated region
      $region9: #{tpu_custom_call.1} parent=5 // pred_check
        _
      $region10: #{tpu_custom_call.1} parent=5 // pred_check_branch
        %183 = sbr.rel (%p180) target = $region12
      $region11: #{tpu_custom_call.1} parent=5 // pred_region
        %s184 = ssub.s32 %s18, 1
        // Predicated region
        $region13: #{tpu_custom_call.1} parent=11 // pred_check
          %p185 = pneg %p51
        $region14: #{tpu_custom_call.1} parent=11 // pred_check_branch
          %187 = sbr.rel (%p185) target = $region16
        $region15: #{tpu_custom_call.1} parent=11 // pred_region
          %s189 = ssub.s32 64, 64
          %190 = vsyncadd [#allocation5], %s189
          %s192 = sshll.u32 %s0, 4
          %s193 = int_to_ptr.vmem [resolvable:$true] %s192
          %195 = dma.vmem_to_smem %s193, 64, [#allocation2], [#allocation5]
        $region16: #{tpu_custom_call.1} parent=11 // pred_fallthru
          _
        // Predicated region
        $region17: #{tpu_custom_call.1} parent=11 // pred_check
          %p196 = pneg %p100
        $region18: #{tpu_custom_call.1} parent=11 // pred_check_branch
          %198 = sbr.rel (%p196) target = $region20
        $region19: #{tpu_custom_call.1} parent=11 // pred_region
          _
        $region20: #{tpu_custom_call.1} parent=11 // pred_fallthru
          _
        // Predicated region
        $region21: #{tpu_custom_call.1} parent=11 // pred_check
          %p199 = pneg %p121
        $region22: #{tpu_custom_call.1} parent=11 // pred_check_branch
          %201 = sbr.rel (%p199) target = $region24
        $region23: #{tpu_custom_call.1} parent=11 // pred_region
          _
        $region24: #{tpu_custom_call.1} parent=11 // pred_fallthru
          _
        // Predicated region
        $region25: #{tpu_custom_call.1} parent=11 // pred_check
          %p202 = pneg %p142
        $region26: #{tpu_custom_call.1} parent=11 // pred_check_branch
          %204 = sbr.rel (%p202) target = $region28
        $region27: #{tpu_custom_call.1} parent=11 // pred_region
          _
        $region28: #{tpu_custom_call.1} parent=11 // pred_fallthru
          _
      $region12: #{tpu_custom_call.1} parent=5 // pred_fallthru
        _
      %p205 = scmp.lt.s32.totalorder %s18, 2
      // Predicated region
      $region29: #{tpu_custom_call.1} parent=5 // pred_check
        %p206 = pneg %p205
      $region30: #{tpu_custom_call.1} parent=5 // pred_check_branch
        %208 = sbr.rel (%p206) target = $region32
      $region31: #{tpu_custom_call.1} parent=5 // pred_region
        // Predicated region
        $region33: #{tpu_custom_call.1} parent=31 // pred_check
          %p209 = pneg %p73
        $region34: #{tpu_custom_call.1} parent=31 // pred_check_branch
          %211 = sbr.rel (%p209) target = $region36
        $region35: #{tpu_custom_call.1} parent=31 // pred_region
          %s212 = sand.u32 %s63, 1
          %s213 = scalar_lea.sflag [#allocation3], %s212
          %s214 = sand.u32 %s63, 1
          %s215 = smul.addr %s214, 64
          %s216 = scalar_lea.vmem [#allocation6], %s215
          %s217 = smul.u32 16, %s26
          %s219 = ssub.s32 1024, 1024
          %220 = vsyncadd %s213, %s219
          %s221 = smul.addr %s25, 16
          %s222 = sadd.s32 %s217, %s221
          %s223 = smul.addr %s222, 64
          %s224 = scalar_lea.hbm %s1, %s223
          %s226 = sshll.u32 %s216, 4
          %s227 = int_to_ptr.vmem [resolvable:$true] %s226
          %229 = dma.hbm_to_vmem [thread:$0]  %s224, 1024, %s227, %s213
        $region36: #{tpu_custom_call.1} parent=31 // pred_fallthru
          _
      $region32: #{tpu_custom_call.1} parent=5 // pred_fallthru
        _
      %p230 = scmp.le.s32.totalorder 1, %s18
      %p231 = scmp.lt.s32.totalorder %s18, 3
      %p232 = pnand %p230, %p231
      %p233 = pneg %p232
      // Predicated region
      $region37: #{tpu_custom_call.1} parent=5 // pred_check
        _
      $region38: #{tpu_custom_call.1} parent=5 // pred_check_branch
        %235 = sbr.rel (%p232) target = $region40
      $region39: #{tpu_custom_call.1} parent=5 // pred_region
        %s236 = ssub.s32 %s18, 1
        // Predicated region
        $region41: #{tpu_custom_call.1} parent=39 // pred_check
          %p237 = pneg %p51
        $region42: #{tpu_custom_call.1} parent=39 // pred_check_branch
          %239 = sbr.rel (%p237) target = $region44
        $region43: #{tpu_custom_call.1} parent=39 // pred_region
          %240 = dma.done [#allocation5], 64
        $region44: #{tpu_custom_call.1} parent=39 // pred_fallthru
          _
        %s241 = sand.u32 %s66, 1
        %s242 = scalar_lea.sflag [#allocation3], %s241
        %s243 = sand.u32 %s66, 1
        %s244 = smul.addr %s243, 64
        %s245 = scalar_lea.vmem [#allocation6], %s244
        // Predicated region
        $region45: #{tpu_custom_call.1} parent=39 // pred_check
          %p246 = pneg %p79
        $region46: #{tpu_custom_call.1} parent=39 // pred_check_branch
          %248 = sbr.rel (%p246) target = $region48
        $region47: #{tpu_custom_call.1} parent=39 // pred_region
          %249 = dma.done %s242, 1024
        $region48: #{tpu_custom_call.1} parent=39 // pred_fallthru
          _
        %250 = sfence
        %p251 = pneg %p51
        %p252 = pneg %p48
        %s253 = sand.u32 %s66, 1
        %s254 = scalar_lea.sflag [#allocation3], %s253
        %s255 = sand.u32 %s66, 1
        %s256 = smul.addr %s255, 64
        %s257 = scalar_lea.vmem [#allocation6], %s256
        %p258 = pneg %p79
        %p259 = pneg %p76
        %p260 = pneg %p100
        %p261 = pneg %p97
        %p262 = pneg %p121
        %p263 = pneg %p118
        %p264 = pneg %p142
        %p265 = pneg %p139
        %p266 = pneg %p170
        %p267 = pneg %p167
        %s268 = sand.u32 %s157, 1
        %s269 = scalar_lea.sflag [#allocation4], %s268
        %s270 = sand.u32 %s157, 1
        %s271 = smul.addr %s270, 64
        %s272 = scalar_lea.vmem [#allocation7], %s271
        %s273 = smul.u32 16, %s28
        %s274 = smul.u32 16, %s28
        %s275 = sld [smem:[#allocation2 + %s27]]
        %s276 = sshra.s32 %s27, 7
        %s277 = sand.u32 %s27, 127
        %s278 = sadd.s32 %s276, 1
        %s279 = smul.u32 %s278, 128
        %s280 = sshra.s32 %s27, 7
        %s281 = sand.u32 %s27, 127
        %s282 = sadd.s32 %s279, %s281
        %s283 = sld [smem:[#allocation2 + %s282]]
        %s284 = sadd.s32 %s276, 2
        %s285 = smul.u32 %s284, 128
        %s286 = sadd.s32 %s285, %s281
        %s287 = sld [smem:[#allocation2 + %s286]]
        %s288 = sadd.s32 %s276, 3
        %s289 = smul.u32 %s288, 128
        %s290 = sadd.s32 %s289, %s281
        %s291 = sld [smem:[#allocation2 + %s290]]
        %v292 = vld [vmem:[%s245] sm:$0xff]
        %v293 = vld [vmem:[%s245 + $0x8] sm:$0xff]
        %v294 = vld [vmem:[%s245 + $0x10] sm:$0xff]
        %v295 = vld [vmem:[%s245 + $0x18] sm:$0xff]
        %v296 = vld [vmem:[%s245 + $0x20] sm:$0xff]
        %v297 = vld [vmem:[%s245 + $0x28] sm:$0xff]
        %v298 = vld [vmem:[%s245 + $0x30] sm:$0xff]
        %v299 = vld [vmem:[%s245 + $0x38] sm:$0xff]
        %v300 = vld [vmem:[%s2] sm:$0xf]
        %302 = vset.pattern.permute.xlu0 0
        %303 = vperm.xlu0 %302, %v300
        %v304 = vpop.permute.xlu0 %303
        %v314 = vlaneseq
        %v315 = vshrl.u32 %v314, 7
        %v316 = vsub.s32 0, %v315
        %v317 = vrot.slane %v292, %v316
        %v318 = vlaneseq
        %v319 = vshrl.u32 %v318, 7
        %v320 = vsub.s32 4, %v319
        %v321 = vrot.slane %v292, %v320
        %v322 = vlaneseq
        %v323 = vshrl.u32 %v322, 7
        %v324 = vsub.s32 0, %v323
        %v325 = vrot.slane %v293, %v324
        %v326 = vlaneseq
        %v327 = vshrl.u32 %v326, 7
        %v328 = vsub.s32 4, %v327
        %v329 = vrot.slane %v293, %v328
        %v330 = vlaneseq
        %v331 = vshrl.u32 %v330, 7
        %v332 = vsub.s32 0, %v331
        %v333 = vrot.slane %v294, %v332
        %v334 = vlaneseq
        %v335 = vshrl.u32 %v334, 7
        %v336 = vsub.s32 4, %v335
        %v337 = vrot.slane %v294, %v336
        %v338 = vlaneseq
        %v339 = vshrl.u32 %v338, 7
        %v340 = vsub.s32 0, %v339
        %v341 = vrot.slane %v295, %v340
        %v342 = vlaneseq
        %v343 = vshrl.u32 %v342, 7
        %v344 = vsub.s32 4, %v343
        %v345 = vrot.slane %v295, %v344
        %v346 = vlaneseq
        %v347 = vshrl.u32 %v346, 7
        %v348 = vsub.s32 0, %v347
        %v349 = vrot.slane %v296, %v348
        %v350 = vlaneseq
        %v351 = vshrl.u32 %v350, 7
        %v352 = vsub.s32 4, %v351
        %v353 = vrot.slane %v296, %v352
        %v354 = vlaneseq
        %v355 = vshrl.u32 %v354, 7
        %v356 = vsub.s32 0, %v355
        %v357 = vrot.slane %v297, %v356
        %v358 = vlaneseq
        %v359 = vshrl.u32 %v358, 7
        %v360 = vsub.s32 4, %v359
        %v361 = vrot.slane %v297, %v360
        %v362 = vlaneseq
        %v363 = vshrl.u32 %v362, 7
        %v364 = vsub.s32 0, %v363
        %v365 = vrot.slane %v298, %v364
        %v366 = vlaneseq
        %v367 = vshrl.u32 %v366, 7
        %v368 = vsub.s32 4, %v367
        %v369 = vrot.slane %v298, %v368
        %v370 = vlaneseq
        %v371 = vshrl.u32 %v370, 7
        %v372 = vsub.s32 0, %v371
        %v373 = vrot.slane %v299, %v372
        %v374 = vlaneseq
        %v375 = vshrl.u32 %v374, 7
        %v376 = vsub.s32 4, %v375
        %v377 = vrot.slane %v299, %v376
        %v394 = vlaneseq
        %v395 = vshrl.u32 %v394, 7
        %v396 = vsub.s32 0, %v395
        %v397 = vrot.slane %v317, %v396
        %v398 = vlaneseq
        %v399 = vshrl.u32 %v398, 7
        %v400 = vsub.s32 0, %v399
        %v401 = vrot.slane %v321, %v400
        %v402 = vlaneseq
        %v403 = vshrl.u32 %v402, 7
        %v404 = vsub.s32 0, %v403
        %v405 = vrot.slane %v325, %v404
        %v406 = vlaneseq
        %v407 = vshrl.u32 %v406, 7
        %v408 = vsub.s32 0, %v407
        %v409 = vrot.slane %v329, %v408
        %v410 = vlaneseq
        %v411 = vshrl.u32 %v410, 7
        %v412 = vsub.s32 0, %v411
        %v413 = vrot.slane %v333, %v412
        %v414 = vlaneseq
        %v415 = vshrl.u32 %v414, 7
        %v416 = vsub.s32 0, %v415
        %v417 = vrot.slane %v337, %v416
        %v418 = vlaneseq
        %v419 = vshrl.u32 %v418, 7
        %v420 = vsub.s32 0, %v419
        %v421 = vrot.slane %v341, %v420
        %v422 = vlaneseq
        %v423 = vshrl.u32 %v422, 7
        %v424 = vsub.s32 0, %v423
        %v425 = vrot.slane %v345, %v424
        %v426 = vlaneseq
        %v427 = vshrl.u32 %v426, 7
        %v428 = vsub.s32 0, %v427
        %v429 = vrot.slane %v349, %v428
        %v430 = vlaneseq
        %v431 = vshrl.u32 %v430, 7
        %v432 = vsub.s32 0, %v431
        %v433 = vrot.slane %v353, %v432
        %v434 = vlaneseq
        %v435 = vshrl.u32 %v434, 7
        %v436 = vsub.s32 0, %v435
        %v437 = vrot.slane %v357, %v436
        %v438 = vlaneseq
        %v439 = vshrl.u32 %v438, 7
        %v440 = vsub.s32 0, %v439
        %v441 = vrot.slane %v361, %v440
        %v442 = vlaneseq
        %v443 = vshrl.u32 %v442, 7
        %v444 = vsub.s32 0, %v443
        %v445 = vrot.slane %v365, %v444
        %v446 = vlaneseq
        %v447 = vshrl.u32 %v446, 7
        %v448 = vsub.s32 0, %v447
        %v449 = vrot.slane %v369, %v448
        %v450 = vlaneseq
        %v451 = vshrl.u32 %v450, 7
        %v452 = vsub.s32 0, %v451
        %v453 = vrot.slane %v373, %v452
        %v454 = vlaneseq
        %v455 = vshrl.u32 %v454, 7
        %v456 = vsub.s32 0, %v455
        %v457 = vrot.slane %v377, %v456
        %v458 = vmul.f32 %v304, %v397
        %v459 = vmul.f32 %v304, %v401
        %v460 = vmul.f32 %v304, %v405
        %v461 = vmul.f32 %v304, %v409
        %v462 = vmul.f32 %v304, %v413
        %v463 = vmul.f32 %v304, %v417
        %v464 = vmul.f32 %v304, %v421
        %v465 = vmul.f32 %v304, %v425
        %v466 = vmul.f32 %v304, %v429
        %v467 = vmul.f32 %v304, %v433
        %v468 = vmul.f32 %v304, %v437
        %v469 = vmul.f32 %v304, %v441
        %v470 = vmul.f32 %v304, %v445
        %v471 = vmul.f32 %v304, %v449
        %v472 = vmul.f32 %v304, %v453
        %v473 = vmul.f32 %v304, %v457
        %474 = vset.pattern.permute.xlu0 1
        %475 = vperm.xlu0 %474, %v300
        %v476 = vpop.permute.xlu0 %475
        %v478 = vlaneseq
        %v479 = vshrl.u32 %v478, 7
        %v480 = vsub.s32 1, %v479
        %v481 = vrot.slane %v292, %v480
        %v482 = vlaneseq
        %v483 = vshrl.u32 %v482, 7
        %v484 = vsub.s32 5, %v483
        %v485 = vrot.slane %v292, %v484
        %v486 = vlaneseq
        %v487 = vshrl.u32 %v486, 7
        %v488 = vsub.s32 1, %v487
        %v489 = vrot.slane %v293, %v488
        %v490 = vlaneseq
        %v491 = vshrl.u32 %v490, 7
        %v492 = vsub.s32 5, %v491
        %v493 = vrot.slane %v293, %v492
        %v494 = vlaneseq
        %v495 = vshrl.u32 %v494, 7
        %v496 = vsub.s32 1, %v495
        %v497 = vrot.slane %v294, %v496
        %v498 = vlaneseq
        %v499 = vshrl.u32 %v498, 7
        %v500 = vsub.s32 5, %v499
        %v501 = vrot.slane %v294, %v500
        %v502 = vlaneseq
        %v503 = vshrl.u32 %v502, 7
        %v504 = vsub.s32 1, %v503
        %v505 = vrot.slane %v295, %v504
        %v506 = vlaneseq
        %v507 = vshrl.u32 %v506, 7
        %v508 = vsub.s32 5, %v507
        %v509 = vrot.slane %v295, %v508
        %v510 = vlaneseq
        %v511 = vshrl.u32 %v510, 7
        %v512 = vsub.s32 1, %v511
        %v513 = vrot.slane %v296, %v512
        %v514 = vlaneseq
        %v515 = vshrl.u32 %v514, 7
        %v516 = vsub.s32 5, %v515
        %v517 = vrot.slane %v296, %v516
        %v518 = vlaneseq
        %v519 = vshrl.u32 %v518, 7
        %v520 = vsub.s32 1, %v519
        %v521 = vrot.slane %v297, %v520
        %v522 = vlaneseq
        %v523 = vshrl.u32 %v522, 7
        %v524 = vsub.s32 5, %v523
        %v525 = vrot.slane %v297, %v524
        %v526 = vlaneseq
        %v527 = vshrl.u32 %v526, 7
        %v528 = vsub.s32 1, %v527
        %v529 = vrot.slane %v298, %v528
        %v530 = vlaneseq
        %v531 = vshrl.u32 %v530, 7
        %v532 = vsub.s32 5, %v531
        %v533 = vrot.slane %v298, %v532
        %v534 = vlaneseq
        %v535 = vshrl.u32 %v534, 7
        %v536 = vsub.s32 1, %v535
        %v537 = vrot.slane %v299, %v536
        %v538 = vlaneseq
        %v539 = vshrl.u32 %v538, 7
        %v540 = vsub.s32 5, %v539
        %v541 = vrot.slane %v299, %v540
        %v558 = vlaneseq
        %v559 = vshrl.u32 %v558, 7
        %v560 = vsub.s32 1, %v559
        %v561 = vrot.slane %v481, %v560
        %v562 = vlaneseq
        %v563 = vshrl.u32 %v562, 7
        %v564 = vsub.s32 1, %v563
        %v565 = vrot.slane %v485, %v564
        %v566 = vlaneseq
        %v567 = vshrl.u32 %v566, 7
        %v568 = vsub.s32 1, %v567
        %v569 = vrot.slane %v489, %v568
        %v570 = vlaneseq
        %v571 = vshrl.u32 %v570, 7
        %v572 = vsub.s32 1, %v571
        %v573 = vrot.slane %v493, %v572
        %v574 = vlaneseq
        %v575 = vshrl.u32 %v574, 7
        %v576 = vsub.s32 1, %v575
        %v577 = vrot.slane %v497, %v576
        %v578 = vlaneseq
        %v579 = vshrl.u32 %v578, 7
        %v580 = vsub.s32 1, %v579
        %v581 = vrot.slane %v501, %v580
        %v582 = vlaneseq
        %v583 = vshrl.u32 %v582, 7
        %v584 = vsub.s32 1, %v583
        %v585 = vrot.slane %v505, %v584
        %v586 = vlaneseq
        %v587 = vshrl.u32 %v586, 7
        %v588 = vsub.s32 1, %v587
        %v589 = vrot.slane %v509, %v588
        %v590 = vlaneseq
        %v591 = vshrl.u32 %v590, 7
        %v592 = vsub.s32 1, %v591
        %v593 = vrot.slane %v513, %v592
        %v594 = vlaneseq
        %v595 = vshrl.u32 %v594, 7
        %v596 = vsub.s32 1, %v595
        %v597 = vrot.slane %v517, %v596
        %v598 = vlaneseq
        %v599 = vshrl.u32 %v598, 7
        %v600 = vsub.s32 1, %v599
        %v601 = vrot.slane %v521, %v600
        %v602 = vlaneseq
        %v603 = vshrl.u32 %v602, 7
        %v604 = vsub.s32 1, %v603
        %v605 = vrot.slane %v525, %v604
        %v606 = vlaneseq
        %v607 = vshrl.u32 %v606, 7
        %v608 = vsub.s32 1, %v607
        %v609 = vrot.slane %v529, %v608
        %v610 = vlaneseq
        %v611 = vshrl.u32 %v610, 7
        %v612 = vsub.s32 1, %v611
        %v613 = vrot.slane %v533, %v612
        %v614 = vlaneseq
        %v615 = vshrl.u32 %v614, 7
        %v616 = vsub.s32 1, %v615
        %v617 = vrot.slane %v537, %v616
        %v618 = vlaneseq
        %v619 = vshrl.u32 %v618, 7
        %v620 = vsub.s32 1, %v619
        %v621 = vrot.slane %v541, %v620
        %v622 = vmul.f32 %v476, %v561
        %v623 = vmul.f32 %v476, %v565
        %v624 = vmul.f32 %v476, %v569
        %v625 = vmul.f32 %v476, %v573
        %v626 = vmul.f32 %v476, %v577
        %v627 = vmul.f32 %v476, %v581
        %v628 = vmul.f32 %v476, %v585
        %v629 = vmul.f32 %v476, %v589
        %v630 = vmul.f32 %v476, %v593
        %v631 = vmul.f32 %v476, %v597
        %v632 = vmul.f32 %v476, %v601
        %v633 = vmul.f32 %v476, %v605
        %v634 = vmul.f32 %v476, %v609
        %v635 = vmul.f32 %v476, %v613
        %v636 = vmul.f32 %v476, %v617
        %v637 = vmul.f32 %v476, %v621
        %v638 = vadd.f32 %v458, %v622
        %v639 = vadd.f32 %v459, %v623
        %v640 = vadd.f32 %v460, %v624
        %v641 = vadd.f32 %v461, %v625
        %v642 = vadd.f32 %v462, %v626
        %v643 = vadd.f32 %v463, %v627
        %v644 = vadd.f32 %v464, %v628
        %v645 = vadd.f32 %v465, %v629
        %v646 = vadd.f32 %v466, %v630
        %v647 = vadd.f32 %v467, %v631
        %v648 = vadd.f32 %v468, %v632
        %v649 = vadd.f32 %v469, %v633
        %v650 = vadd.f32 %v470, %v634
        %v651 = vadd.f32 %v471, %v635
        %v652 = vadd.f32 %v472, %v636
        %v653 = vadd.f32 %v473, %v637
        %654 = vset.pattern.permute.xlu0 2
        %655 = vperm.xlu0 %654, %v300
        %v656 = vpop.permute.xlu0 %655
        %v658 = vlaneseq
        %v659 = vshrl.u32 %v658, 7
        %v660 = vsub.s32 2, %v659
        %v661 = vrot.slane %v292, %v660
        %v662 = vlaneseq
        %v663 = vshrl.u32 %v662, 7
        %v664 = vsub.s32 6, %v663
        %v665 = vrot.slane %v292, %v664
        %v666 = vlaneseq
        %v667 = vshrl.u32 %v666, 7
        %v668 = vsub.s32 2, %v667
        %v669 = vrot.slane %v293, %v668
        %v670 = vlaneseq
        %v671 = vshrl.u32 %v670, 7
        %v672 = vsub.s32 6, %v671
        %v673 = vrot.slane %v293, %v672
        %v674 = vlaneseq
        %v675 = vshrl.u32 %v674, 7
        %v676 = vsub.s32 2, %v675
        %v677 = vrot.slane %v294, %v676
        %v678 = vlaneseq
        %v679 = vshrl.u32 %v678, 7
        %v680 = vsub.s32 6, %v679
        %v681 = vrot.slane %v294, %v680
        %v682 = vlaneseq
        %v683 = vshrl.u32 %v682, 7
        %v684 = vsub.s32 2, %v683
        %v685 = vrot.slane %v295, %v684
        %v686 = vlaneseq
        %v687 = vshrl.u32 %v686, 7
        %v688 = vsub.s32 6, %v687
        %v689 = vrot.slane %v295, %v688
        %v690 = vlaneseq
        %v691 = vshrl.u32 %v690, 7
        %v692 = vsub.s32 2, %v691
        %v693 = vrot.slane %v296, %v692
        %v694 = vlaneseq
        %v695 = vshrl.u32 %v694, 7
        %v696 = vsub.s32 6, %v695
        %v697 = vrot.slane %v296, %v696
        %v698 = vlaneseq
        %v699 = vshrl.u32 %v698, 7
        %v700 = vsub.s32 2, %v699
        %v701 = vrot.slane %v297, %v700
        %v702 = vlaneseq
        %v703 = vshrl.u32 %v702, 7
        %v704 = vsub.s32 6, %v703
        %v705 = vrot.slane %v297, %v704
        %v706 = vlaneseq
        %v707 = vshrl.u32 %v706, 7
        %v708 = vsub.s32 2, %v707
        %v709 = vrot.slane %v298, %v708
        %v710 = vlaneseq
        %v711 = vshrl.u32 %v710, 7
        %v712 = vsub.s32 6, %v711
        %v713 = vrot.slane %v298, %v712
        %v714 = vlaneseq
        %v715 = vshrl.u32 %v714, 7
        %v716 = vsub.s32 2, %v715
        %v717 = vrot.slane %v299, %v716
        %v718 = vlaneseq
        %v719 = vshrl.u32 %v718, 7
        %v720 = vsub.s32 6, %v719
        %v721 = vrot.slane %v299, %v720
        %v738 = vlaneseq
        %v739 = vshrl.u32 %v738, 7
        %v740 = vsub.s32 2, %v739
        %v741 = vrot.slane %v661, %v740
        %v742 = vlaneseq
        %v743 = vshrl.u32 %v742, 7
        %v744 = vsub.s32 2, %v743
        %v745 = vrot.slane %v665, %v744
        %v746 = vlaneseq
        %v747 = vshrl.u32 %v746, 7
        %v748 = vsub.s32 2, %v747
        %v749 = vrot.slane %v669, %v748
        %v750 = vlaneseq
        %v751 = vshrl.u32 %v750, 7
        %v752 = vsub.s32 2, %v751
        %v753 = vrot.slane %v673, %v752
        %v754 = vlaneseq
        %v755 = vshrl.u32 %v754, 7
        %v756 = vsub.s32 2, %v755
        %v757 = vrot.slane %v677, %v756
        %v758 = vlaneseq
        %v759 = vshrl.u32 %v758, 7
        %v760 = vsub.s32 2, %v759
        %v761 = vrot.slane %v681, %v760
        %v762 = vlaneseq
        %v763 = vshrl.u32 %v762, 7
        %v764 = vsub.s32 2, %v763
        %v765 = vrot.slane %v685, %v764
        %v766 = vlaneseq
        %v767 = vshrl.u32 %v766, 7
        %v768 = vsub.s32 2, %v767
        %v769 = vrot.slane %v689, %v768
        %v770 = vlaneseq
        %v771 = vshrl.u32 %v770, 7
        %v772 = vsub.s32 2, %v771
        %v773 = vrot.slane %v693, %v772
        %v774 = vlaneseq
        %v775 = vshrl.u32 %v774, 7
        %v776 = vsub.s32 2, %v775
        %v777 = vrot.slane %v697, %v776
        %v778 = vlaneseq
        %v779 = vshrl.u32 %v778, 7
        %v780 = vsub.s32 2, %v779
        %v781 = vrot.slane %v701, %v780
        %v782 = vlaneseq
        %v783 = vshrl.u32 %v782, 7
        %v784 = vsub.s32 2, %v783
        %v785 = vrot.slane %v705, %v784
        %v786 = vlaneseq
        %v787 = vshrl.u32 %v786, 7
        %v788 = vsub.s32 2, %v787
        %v789 = vrot.slane %v709, %v788
        %v790 = vlaneseq
        %v791 = vshrl.u32 %v790, 7
        %v792 = vsub.s32 2, %v791
        %v793 = vrot.slane %v713, %v792
        %v794 = vlaneseq
        %v795 = vshrl.u32 %v794, 7
        %v796 = vsub.s32 2, %v795
        %v797 = vrot.slane %v717, %v796
        %v798 = vlaneseq
        %v799 = vshrl.u32 %v798, 7
        %v800 = vsub.s32 2, %v799
        %v801 = vrot.slane %v721, %v800
        %v802 = vmul.f32 %v656, %v741
        %v803 = vmul.f32 %v656, %v745
        %v804 = vmul.f32 %v656, %v749
        %v805 = vmul.f32 %v656, %v753
        %v806 = vmul.f32 %v656, %v757
        %v807 = vmul.f32 %v656, %v761
        %v808 = vmul.f32 %v656, %v765
        %v809 = vmul.f32 %v656, %v769
        %v810 = vmul.f32 %v656, %v773
        %v811 = vmul.f32 %v656, %v777
        %v812 = vmul.f32 %v656, %v781
        %v813 = vmul.f32 %v656, %v785
        %v814 = vmul.f32 %v656, %v789
        %v815 = vmul.f32 %v656, %v793
        %v816 = vmul.f32 %v656, %v797
        %v817 = vmul.f32 %v656, %v801
        %v818 = vadd.f32 %v638, %v802
        %v819 = vadd.f32 %v639, %v803
        %v820 = vadd.f32 %v640, %v804
        %v821 = vadd.f32 %v641, %v805
        %v822 = vadd.f32 %v642, %v806
        %v823 = vadd.f32 %v643, %v807
        %v824 = vadd.f32 %v644, %v808
        %v825 = vadd.f32 %v645, %v809
        %v826 = vadd.f32 %v646, %v810
        %v827 = vadd.f32 %v647, %v811
        %v828 = vadd.f32 %v648, %v812
        %v829 = vadd.f32 %v649, %v813
        %v830 = vadd.f32 %v650, %v814
        %v831 = vadd.f32 %v651, %v815
        %v832 = vadd.f32 %v652, %v816
        %v833 = vadd.f32 %v653, %v817
        %834 = vset.pattern.permute.xlu0 3
        %835 = vperm.xlu0 %834, %v300
        %v836 = vpop.permute.xlu0 %835
        %v838 = vlaneseq
        %v839 = vshrl.u32 %v838, 7
        %v840 = vsub.s32 3, %v839
        %v841 = vrot.slane %v292, %v840
        %v842 = vlaneseq
        %v843 = vshrl.u32 %v842, 7
        %v844 = vsub.s32 7, %v843
        %v845 = vrot.slane %v292, %v844
        %v846 = vlaneseq
        %v847 = vshrl.u32 %v846, 7
        %v848 = vsub.s32 3, %v847
        %v849 = vrot.slane %v293, %v848
        %v850 = vlaneseq
        %v851 = vshrl.u32 %v850, 7
        %v852 = vsub.s32 7, %v851
        %v853 = vrot.slane %v293, %v852
        %v854 = vlaneseq
        %v855 = vshrl.u32 %v854, 7
        %v856 = vsub.s32 3, %v855
        %v857 = vrot.slane %v294, %v856
        %v858 = vlaneseq
        %v859 = vshrl.u32 %v858, 7
        %v860 = vsub.s32 7, %v859
        %v861 = vrot.slane %v294, %v860
        %v862 = vlaneseq
        %v863 = vshrl.u32 %v862, 7
        %v864 = vsub.s32 3, %v863
        %v865 = vrot.slane %v295, %v864
        %v866 = vlaneseq
        %v867 = vshrl.u32 %v866, 7
        %v868 = vsub.s32 7, %v867
        %v869 = vrot.slane %v295, %v868
        %v870 = vlaneseq
        %v871 = vshrl.u32 %v870, 7
        %v872 = vsub.s32 3, %v871
        %v873 = vrot.slane %v296, %v872
        %v874 = vlaneseq
        %v875 = vshrl.u32 %v874, 7
        %v876 = vsub.s32 7, %v875
        %v877 = vrot.slane %v296, %v876
        %v878 = vlaneseq
        %v879 = vshrl.u32 %v878, 7
        %v880 = vsub.s32 3, %v879
        %v881 = vrot.slane %v297, %v880
        %v882 = vlaneseq
        %v883 = vshrl.u32 %v882, 7
        %v884 = vsub.s32 7, %v883
        %v885 = vrot.slane %v297, %v884
        %v886 = vlaneseq
        %v887 = vshrl.u32 %v886, 7
        %v888 = vsub.s32 3, %v887
        %v889 = vrot.slane %v298, %v888
        %v890 = vlaneseq
        %v891 = vshrl.u32 %v890, 7
        %v892 = vsub.s32 7, %v891
        %v893 = vrot.slane %v298, %v892
        %v894 = vlaneseq
        %v895 = vshrl.u32 %v894, 7
        %v896 = vsub.s32 3, %v895
        %v897 = vrot.slane %v299, %v896
        %v898 = vlaneseq
        %v899 = vshrl.u32 %v898, 7
        %v900 = vsub.s32 7, %v899
        %v901 = vrot.slane %v299, %v900
        %v918 = vlaneseq
        %v919 = vshrl.u32 %v918, 7
        %v920 = vsub.s32 3, %v919
        %v921 = vrot.slane %v841, %v920
        %v922 = vlaneseq
        %v923 = vshrl.u32 %v922, 7
        %v924 = vsub.s32 3, %v923
        %v925 = vrot.slane %v845, %v924
        %v926 = vlaneseq
        %v927 = vshrl.u32 %v926, 7
        %v928 = vsub.s32 3, %v927
        %v929 = vrot.slane %v849, %v928
        %v930 = vlaneseq
        %v931 = vshrl.u32 %v930, 7
        %v932 = vsub.s32 3, %v931
        %v933 = vrot.slane %v853, %v932
        %v934 = vlaneseq
        %v935 = vshrl.u32 %v934, 7
        %v936 = vsub.s32 3, %v935
        %v937 = vrot.slane %v857, %v936
        %v938 = vlaneseq
        %v939 = vshrl.u32 %v938, 7
        %v940 = vsub.s32 3, %v939
        %v941 = vrot.slane %v861, %v940
        %v942 = vlaneseq
        %v943 = vshrl.u32 %v942, 7
        %v944 = vsub.s32 3, %v943
        %v945 = vrot.slane %v865, %v944
        %v946 = vlaneseq
        %v947 = vshrl.u32 %v946, 7
        %v948 = vsub.s32 3, %v947
        %v949 = vrot.slane %v869, %v948
        %v950 = vlaneseq
        %v951 = vshrl.u32 %v950, 7
        %v952 = vsub.s32 3, %v951
        %v953 = vrot.slane %v873, %v952
        %v954 = vlaneseq
        %v955 = vshrl.u32 %v954, 7
        %v956 = vsub.s32 3, %v955
        %v957 = vrot.slane %v877, %v956
        %v958 = vlaneseq
        %v959 = vshrl.u32 %v958, 7
        %v960 = vsub.s32 3, %v959
        %v961 = vrot.slane %v881, %v960
        %v962 = vlaneseq
        %v963 = vshrl.u32 %v962, 7
        %v964 = vsub.s32 3, %v963
        %v965 = vrot.slane %v885, %v964
        %v966 = vlaneseq
        %v967 = vshrl.u32 %v966, 7
        %v968 = vsub.s32 3, %v967
        %v969 = vrot.slane %v889, %v968
        %v970 = vlaneseq
        %v971 = vshrl.u32 %v970, 7
        %v972 = vsub.s32 3, %v971
        %v973 = vrot.slane %v893, %v972
        %v974 = vlaneseq
        %v975 = vshrl.u32 %v974, 7
        %v976 = vsub.s32 3, %v975
        %v977 = vrot.slane %v897, %v976
        %v978 = vlaneseq
        %v979 = vshrl.u32 %v978, 7
        %v980 = vsub.s32 3, %v979
        %v981 = vrot.slane %v901, %v980
        %v982 = vmul.f32 %v836, %v921
        %v983 = vmul.f32 %v836, %v925
        %v984 = vmul.f32 %v836, %v929
        %v985 = vmul.f32 %v836, %v933
        %v986 = vmul.f32 %v836, %v937
        %v987 = vmul.f32 %v836, %v941
        %v988 = vmul.f32 %v836, %v945
        %v989 = vmul.f32 %v836, %v949
        %v990 = vmul.f32 %v836, %v953
        %v991 = vmul.f32 %v836, %v957
        %v992 = vmul.f32 %v836, %v961
        %v993 = vmul.f32 %v836, %v965
        %v994 = vmul.f32 %v836, %v969
        %v995 = vmul.f32 %v836, %v973
        %v996 = vmul.f32 %v836, %v977
        %v997 = vmul.f32 %v836, %v981
        %v998 = vadd.f32 %v818, %v982
        %v999 = vadd.f32 %v819, %v983
        %v1000 = vadd.f32 %v820, %v984
        %v1001 = vadd.f32 %v821, %v985
        %v1002 = vadd.f32 %v822, %v986
        %v1003 = vadd.f32 %v823, %v987
        %v1004 = vadd.f32 %v824, %v988
        %v1005 = vadd.f32 %v825, %v989
        %v1006 = vadd.f32 %v826, %v990
        %v1007 = vadd.f32 %v827, %v991
        %v1008 = vadd.f32 %v828, %v992
        %v1009 = vadd.f32 %v829, %v993
        %v1010 = vadd.f32 %v830, %v994
        %v1011 = vadd.f32 %v831, %v995
        %v1012 = vadd.f32 %v832, %v996
        %v1013 = vadd.f32 %v833, %v997
        %v1014 = vld [vmem:[%s3] sm:$0xf]
        %v1015 = vld [vmem:[%s4] sm:$0xf]
        %v1016 = vstv %s291
        %v1017 = vmul.f32 %v1016, %v1015
        %v1018 = vadd.f32 %v1014, %v1017
        %v1019 = vstv %s287
        %v1020 = vmul.f32 %v1019, %v1018
        %v1021 = vstv %s275
        %v1022 = vmul.f32 %v1021, %v292
        %v1023 = vmul.f32 %v1021, %v293
        %v1024 = vmul.f32 %v1021, %v294
        %v1025 = vmul.f32 %v1021, %v295
        %v1026 = vmul.f32 %v1021, %v296
        %v1027 = vmul.f32 %v1021, %v297
        %v1028 = vmul.f32 %v1021, %v298
        %v1029 = vmul.f32 %v1021, %v299
        %v1030 = vstv %s283
        %v1031 = vmul.f32 %v1030, %v998
        %v1032 = vmul.f32 %v1030, %v999
        %v1033 = vmul.f32 %v1030, %v1000
        %v1034 = vmul.f32 %v1030, %v1001
        %v1035 = vmul.f32 %v1030, %v1002
        %v1036 = vmul.f32 %v1030, %v1003
        %v1037 = vmul.f32 %v1030, %v1004
        %v1038 = vmul.f32 %v1030, %v1005
        %v1039 = vmul.f32 %v1030, %v1006
        %v1040 = vmul.f32 %v1030, %v1007
        %v1041 = vmul.f32 %v1030, %v1008
        %v1042 = vmul.f32 %v1030, %v1009
        %v1043 = vmul.f32 %v1030, %v1010
        %v1044 = vmul.f32 %v1030, %v1011
        %v1045 = vmul.f32 %v1030, %v1012
        %v1046 = vmul.f32 %v1030, %v1013
        %v1063 = vcombine.low %v1031, %v1032
        %v1064 = vcombine.low %v1033, %v1034
        %v1065 = vcombine.low %v1035, %v1036
        %v1066 = vcombine.low %v1037, %v1038
        %v1067 = vcombine.low %v1039, %v1040
        %v1068 = vcombine.low %v1041, %v1042
        %v1069 = vcombine.low %v1043, %v1044
        %v1070 = vcombine.low %v1045, %v1046
        %v1079 = vadd.f32 %v1022, %v1063
        %v1080 = vadd.f32 %v1023, %v1064
        %v1081 = vadd.f32 %v1024, %v1065
        %v1082 = vadd.f32 %v1025, %v1066
        %v1083 = vadd.f32 %v1026, %v1067
        %v1084 = vadd.f32 %v1027, %v1068
        %v1085 = vadd.f32 %v1028, %v1069
        %v1086 = vadd.f32 %v1029, %v1070
        %1088 = vset.pattern.permute.xlu0 0
        %1089 = vperm.xlu0 %1088, %v1020
        %v1090 = vpop.permute.xlu0 %1089
        %v1092 = vunpack.c.l.s4 839922192
        %v1093 = vunpack.c.0.s8 %v1092
        %v1094 = vlaneseq
        %v1095 = vshrl.u32 %v1094, 7
        %v1096 = vsub.s32 %v1093, %v1095
        %v1097 = vrot.slane %v1090, %v1096
        %v1099 = vadd.f32 %v1079, %v1097
        %v1100 = vadd.f32 %v1080, %v1097
        %v1101 = vadd.f32 %v1081, %v1097
        %v1102 = vadd.f32 %v1082, %v1097
        %v1103 = vadd.f32 %v1083, %v1097
        %v1104 = vadd.f32 %v1084, %v1097
        %v1105 = vadd.f32 %v1085, %v1097
        %v1106 = vadd.f32 %v1086, %v1097
        %1107 = vst [vmem:[%s272] sm:$0xff] %v1099
        %1108 = vst [vmem:[%s272 + $0x8] sm:$0xff] %v1100
        %1109 = vst [vmem:[%s272 + $0x10] sm:$0xff] %v1101
        %1110 = vst [vmem:[%s272 + $0x18] sm:$0xff] %v1102
        %1111 = vst [vmem:[%s272 + $0x20] sm:$0xff] %v1103
        %1112 = vst [vmem:[%s272 + $0x28] sm:$0xff] %v1104
        %1113 = vst [vmem:[%s272 + $0x30] sm:$0xff] %v1105
        %1114 = vst [vmem:[%s272 + $0x38] sm:$0xff] %v1106
        %s1115 = sand.u32 %s157, 1
        %s1116 = scalar_lea.sflag [#allocation4], %s1115
        %s1117 = sand.u32 %s157, 1
        %s1118 = smul.addr %s1117, 64
        %s1119 = scalar_lea.vmem [#allocation7], %s1118
        // Predicated region
        $region49: #{tpu_custom_call.1} parent=39 // pred_check
          %p1120 = pneg %p167
        $region50: #{tpu_custom_call.1} parent=39 // pred_check_branch
          %1122 = sbr.rel (%p1120) target = $region52
        $region51: #{tpu_custom_call.1} parent=39 // pred_region
          %s1123 = smul.u32 16, %s28
          %s1125 = ssub.s32 1024, 1024
          %1126 = vsyncadd %s1116, %s1125
          %s1127 = smul.addr %s27, 16
          %s1128 = sadd.s32 %s1123, %s1127
          %s1129 = smul.addr %s1128, 64
          %s1130 = scalar_lea.hbm %s5, %s1129
          %s1132 = sshll.u32 %s1119, 4
          %s1133 = int_to_ptr.vmem [resolvable:$true] %s1132
          %1135 = dma.vmem_to_hbm [thread:$0]  %s1133, 1024, %s1130, %s1116
        $region52: #{tpu_custom_call.1} parent=39 // pred_fallthru
          _
      $region40: #{tpu_custom_call.1} parent=5 // pred_fallthru
        _
      %p1136 = scmp.le.s32.totalorder 2, %s18
      // Predicated region
      $region53: #{tpu_custom_call.1} parent=5 // pred_check
        %p1137 = pneg %p1136
      $region54: #{tpu_custom_call.1} parent=5 // pred_check_branch
        %1139 = sbr.rel (%p1137) target = $region56
      $region55: #{tpu_custom_call.1} parent=5 // pred_region
        %s1140 = ssub.s32 %s18, 2
        // Predicated region
        $region57: #{tpu_custom_call.1} parent=55 // pred_check
          %p1141 = pneg %p173
        $region58: #{tpu_custom_call.1} parent=55 // pred_check_branch
          %1143 = sbr.rel (%p1141) target = $region60
        $region59: #{tpu_custom_call.1} parent=55 // pred_region
          %s1144 = sand.u32 %s158, 1
          %s1145 = scalar_lea.sflag [#allocation4], %s1144
          %s1146 = sand.u32 %s158, 1
          %s1147 = smul.addr %s1146, 64
          %s1148 = scalar_lea.vmem [#allocation7], %s1147
          %1149 = dma.done %s1145, 1024
        $region60: #{tpu_custom_call.1} parent=55 // pred_fallthru
          _
      $region56: #{tpu_custom_call.1} parent=5 // pred_fallthru
        _
    $region6: #{tpu_custom_call.1} parent=1 // loop_footer
      %s22 = sadd.s32 1, %s18
    $region7: #{tpu_custom_call.1} parent=1 // loop_footer_branch
      %17 = sbr.rel target = $region3
    $region8: #{tpu_custom_call.1} parent=1 // loop_exit
      _
    %1150 = vsyncpa [#allocation3], 1
    %s1151 = scalar_lea.sflag [#allocation3], 1
    %1152 = vsyncpa %s1151, 1
    %1153 = vsyncpa [#allocation4], 1
    %s1154 = scalar_lea.sflag [#allocation4], 1
    %1155 = vsyncpa %s1154, 1
    %1156 = vsyncpa [#allocation5], 1
    %s1157 = scalar_lea.sflag [#allocation5], 1
    %1158 = vsyncpa %s1157, 1

</llo_original>
